<compile_context>
chip_gen: v6e
topology: v6e:2x2x1
jax: 0.10.0
libtpu: 0.0.40
codegen_flags: <defaults>
</compile_context>

<pallas_src>
import functools

import jax
import jax.numpy as jnp
from jax.experimental import pallas as pl
from jax.experimental.pallas import tpu as pltpu

# Static model geometry implied by linear1.in_features == 64 (T=150 time frames, 13 mfcc).
_T, _F = 150, 13
_KH1, _KH2, _SH = 11, 12, 3
_POOL = 23
_H = (_T - _KH2) // _SH + 1          # 47 conv-output rows (same for both branches at T=150)
_RP = _H + 1                         # 48: pad height to a sublane multiple; row 47 is a dummy
_KF = _KH2 * _F + 1                  # 157: 156 patch columns + 1 ones column (conv-bias carrier)


# ---------------------------------------------------------------------------
# Pallas kernel: full forward for TB batch elements per grid step.
# ---------------------------------------------------------------------------
def _backchannel_kernel(p_ref, wc_ref, w1_ref, w2_ref, b2_ref, out_ref, *, tb):
    # Fused conv1+conv2 (+bias via ones column) as one MXU matmul, then ReLU.
    c = jnp.dot(p_ref[...], wc_ref[...], preferred_element_type=jnp.float32)  # (TB*48, 32)
    c = jnp.maximum(c, 0.0)
    c3 = c.reshape(tb, _RP, 32)                                                # (TB, 48, 32)

    # MaxPool2d((23,1)), floor mode: windows rows [0,23) and [23,46); rows 46/47 dropped.
    # Mask-based max over the full height (values are post-ReLU >= 0, so 0 is a safe fill).
    local = jax.lax.broadcasted_iota(jnp.int32, (1, _RP, 1), 1)
    win0 = jnp.max(jnp.where(local < _POOL, c3, 0.0), axis=1)                           # (TB, 32)
    win1 = jnp.max(jnp.where((local >= _POOL) & (local < 2 * _POOL), c3, 0.0), axis=1)  # (TB, 32)

    # Feature vector + ones column (carries linear1 bias). wl1 rows were permuted in the
    # wrapper so this (window, branch, channel) order matches PyTorch's flatten(1) order.
    feat = jnp.concatenate([win0, win1, jnp.ones((tb, 1), jnp.float32)], axis=1)  # (TB, 65)

    # linear1 + ReLU   (dropout(0.5) is identity at inference)
    h = jnp.maximum(jnp.dot(feat, w1_ref[...], preferred_element_type=jnp.float32), 0.0)  # (TB,100)

    # linear2 + softmax(dim=1)
    logits = jnp.dot(h, w2_ref[...], preferred_element_type=jnp.float32) + b2_ref[...]    # (TB, 3)
    m = jnp.max(logits, axis=1, keepdims=True)
    e = jnp.exp(logits - m)
    s = jnp.sum(e, axis=1, keepdims=True)
    inv = pl.reciprocal(s, approx=True)
    inv = inv * (2.0 - s * inv)          # one Newton step -> ~full f32 precision, still EUP path
    out_ref[...] = e * inv


# ---------------------------------------------------------------------------
# Wrapper: parameter fusion / im2col glue + pallas_call.
# ---------------------------------------------------------------------------
@jax.jit
def backchanneler_forward_pallas(x, params):
    (wc1, bc1), (wc2, bc2), (wl1, bl1), (wl2, bl2) = params

    B, T, F = x.shape
    assert (T, F) == (_T, _F), "expected (B, 150, 13) input"
    assert (_T - _KH1) // _SH + 1 == _H and _H // _POOL == 2
    assert wl1.shape == (64, 100) and wl2.shape == (100, 3)

    # ---- batch blocking: TB elements per grid step, >= 2 grid steps when B >= 2 ----
    TB = 1 if B <= 1 else min(32, pl.cdiv(B, 2))
    G = pl.cdiv(B, TB)
    B_pad = G * TB

    # ---- shared im2col over conv2's (12,13) footprint (superset of conv1's) ----
    rows = (jnp.arange(_H) * _SH)[:, None] + jnp.arange(_KH2)[None, :]     # (47, 12)
    p = x[:, rows, :].reshape(B, _H, _KH2 * F)                              # (B, 47, 156)
    p = jnp.pad(p, ((0, B_pad - B), (0, 1), (0, 0)))                        # (B_pad, 48, 156)
    ones = jnp.ones((B_pad, _RP, 1), p.dtype)
    patches = jnp.concatenate([p, ones], axis=-1)                           # (B_pad, 48, 157)
    patches = patches.reshape(B_pad * _RP, _KF).astype(jnp.float32)         # (B_pad*48, 157)

    # ---- fused conv weights: (157, 32) = [[W1 ; zero-pad] | W2] with a bias row appended ----
    w1c = jnp.concatenate(
        [wc1.reshape(16, _KH1 * F).T, jnp.zeros(((_KH2 - _KH1) * F, 16), jnp.float32)], axis=0)
    w2c = wc2.reshape(16, _KH2 * F).T
    wc = jnp.concatenate(
        [jnp.concatenate([w1c, w2c], axis=1),
         jnp.concatenate([bc1, bc2]).reshape(1, 32)], axis=0)               # (157, 32)

    # ---- linear1: permute rows from kernel feature order (window, branch, channel) to
    #      PyTorch flatten(1) order (branch, channel, window); append bias row ----
    perm = []
    for f in range(64):
        w, rest = divmod(f, 32)
        br, ch = divmod(rest, 16)
        perm.append(br * 32 + ch * 2 + w)
    w1full = jnp.concatenate([wl1[jnp.array(perm), :], bl1.reshape(1, 100)], axis=0)  # (65, 100)
    b2m = bl2.reshape(1, 3)

    kernel = functools.partial(_backchannel_kernel, tb=TB)

    out = pl.pallas_call(
        kernel,
        out_shape=jax.ShapeDtypeStruct((G, TB, 3), jnp.float32),
        grid_spec=pltpu.PrefetchScalarGridSpec(
            num_scalar_prefetch=0,
            grid=(G,),
            in_specs=[
                pl.BlockSpec((TB * _RP, _KF), lambda i: (i, 0)),   # patch slab per batch block
                pl.BlockSpec((_KF, 32), lambda i: (0, 0)),          # fused conv W + bias
                pl.BlockSpec((65, 100), lambda i: (0, 0)),          # linear1 W + bias row
                pl.BlockSpec((100, 3), lambda i: (0, 0)),           # linear2 W
                pl.BlockSpec((1, 3), lambda i: (0, 0)),             # linear2 bias
            ],
            out_specs=pl.BlockSpec((None, TB, 3), lambda i: (i, 0, 0)),
        ),
        compiler_params=pltpu.CompilerParams(dimension_semantics=("parallel",)),
    )(patches, wc, w1full, wl2, b2m)

    return out.reshape(B_pad, 3)[:B]


# ---------------------------------------------------------------------------
# Plain-JAX reference (mirrors the PyTorch module exactly, eval mode).
# ---------------------------------------------------------------------------
def backchanneler_forward_ref(x, params):
    (wc1, bc1), (wc2, bc2), (wl1, bl1), (wl2, bl2) = params
    xin = x[:, None, :, :]  # NCHW, C=1

    def branch(w, b):
        y = jax.lax.conv_general_dilated(
            xin, w, window_strides=(3, 1), padding="VALID",
            dimension_numbers=("NCHW", "OIHW", "NCHW"),
            precision=jax.lax.Precision.HIGHEST)
        y = jnp.maximum(y + b[None, :, None, None], 0.0)
        y = jax.lax.reduce_window(y, -jnp.inf, jax.lax.max,
                                  (1, 1, 23, 1), (1, 1, 23, 1), "VALID")
        return y.reshape(y.shape[0], -1)   # == torch .flatten(1): channel-major

    feat = jnp.concatenate([branch(wc1, bc1), branch(wc2, bc2)], axis=1)
    h = jnp.maximum(jnp.dot(feat, wl1, precision=jax.lax.Precision.HIGHEST) + bl1, 0.0)
    logits = jnp.dot(h, wl2, precision=jax.lax.Precision.HIGHEST) + bl2
    return jax.nn.softmax(logits, axis=1)


# ---------------------------------------------------------------------------
def make_params(key):
    ks = jax.random.split(key, 8)
    s = 0.1
    wc1 = s * jax.random.normal(ks[0], (16, 1, 11, 13), jnp.float32)   # OIHW
    bc1 = s * jax.random.normal(ks[1], (16,), jnp.float32)
    wc2 = s * jax.random.normal(ks[2], (16, 1, 12, 13), jnp.float32)   # OIHW
    bc2 = s * jax.random.normal(ks[3], (16,), jnp.float32)
    wl1 = s * jax.random.normal(ks[4], (64, 100), jnp.float32)         # (in, out)
    bl1 = s * jax.random.normal(ks[5], (100,), jnp.float32)
    wl2 = s * jax.random.normal(ks[6], (100, 3), jnp.float32)          # (in, out)
    bl2 = s * jax.random.normal(ks[7], (3,), jnp.float32)
    return ((wc1, bc1), (wc2, bc2), (wl1, bl1), (wl2, bl2))


if __name__ == "__main__":
    key = jax.random.PRNGKey(0)
    kx, kp = jax.random.split(key)
    # (batch=2, 150 time frames, 13 mfcc features) -- the shape linear1(in_features=64) implies.
    x = jax.random.normal(kx, (2, 150, 13), jnp.float32)
    params = make_params(kp)

    out = jax.block_until_ready(backchanneler_forward_pallas(x, params))
    ref = jax.block_until_ready(backchanneler_forward_ref(x, params))

    assert out.shape == (2, 3)
    assert bool(jnp.allclose(out, ref, atol=1e-3, rtol=1e-3)), (
        f"mismatch: max abs diff {float(jnp.max(jnp.abs(out - ref)))}")

    print("KERNEL_OK")
</pallas_src>

<mosaic_0001>
module attributes {stable_mosaic.version = 11 : i64} {
  func.func @_backchannel_kernel(%arg0: i32, %arg1: memref<48x157xf32, #tpu.memory_space<vmem>>, %arg2: memref<157x32xf32, #tpu.memory_space<vmem>>, %arg3: memref<65x100xf32, #tpu.memory_space<vmem>>, %arg4: memref<100x3xf32, #tpu.memory_space<vmem>>, %arg5: memref<1x3xf32, #tpu.memory_space<vmem>>, %arg6: memref<1x1x3xf32, #tpu.memory_space<vmem>>) attributes {dimension_semantics = [#tpu.dimension_semantics<parallel>], iteration_bounds = array<i64: 2>, scalar_prefetch = 0 : i64, scratch_operands = 0 : i64, tpu.core_type = #tpu.core_type<tc>, window_params = [{transform_indices = @transform_0, window_bounds = array<i64: 48, 157>}, {pipeline_mode = #tpu.pipeline_mode<synchronous>, transform_indices = @transform_1, window_bounds = array<i64: 157, 32>}, {pipeline_mode = #tpu.pipeline_mode<synchronous>, transform_indices = @transform_2, window_bounds = array<i64: 65, 100>}, {pipeline_mode = #tpu.pipeline_mode<synchronous>, transform_indices = @transform_3, window_bounds = array<i64: 100, 3>}, {pipeline_mode = #tpu.pipeline_mode<synchronous>, transform_indices = @transform_4, window_bounds = array<i64: 1, 3>}, {transform_indices = @transform_5, window_bounds = array<i64: 1, 1, 3>}]} {
    %c0 = arith.constant 0 : index
    %c0_0 = arith.constant 0 : index
    %0 = vector.load %arg1[%c0, %c0_0] : memref<48x157xf32, #tpu.memory_space<vmem>>, vector<48x157xf32>
    %c0_1 = arith.constant 0 : index
    %c0_2 = arith.constant 0 : index
    %1 = vector.load %arg2[%c0_1, %c0_2] : memref<157x32xf32, #tpu.memory_space<vmem>>, vector<157x32xf32>
    %cst = arith.constant dense<0.000000e+00> : vector<48x32xf32>
    %2 = tpu.matmul %0, %1, %cst {dimension_numbers = #tpu.dot_dimension_numbers<[1], [0], [0], [1], [0, 0, 1, 1], [], []>} : vector<48x157xf32>, vector<157x32xf32>, vector<48x32xf32> -> vector<48x32xf32>
    %cst_3 = arith.constant 0.000000e+00 : f32
    %3 = vector.broadcast %cst_3 : f32 to vector<48x32xf32>
    %4 = arith.maximumf %2, %3 : vector<48x32xf32>
    %5 = vector.shape_cast %4 : vector<48x32xf32> to vector<1x48x32xf32>
    %6 = tpu.iota {dimensions = array<i32: 1>} : vector<1x48x1xi32>
    %c23_i32 = arith.constant 23 : i32
    %7 = vector.broadcast %c23_i32 : i32 to vector<1x48x1xi32>
    %8 = arith.cmpi slt, %6, %7 : vector<1x48x1xi32>
    %cst_4 = arith.constant 0.000000e+00 : f32
    %9 = vector.shape_cast %8 : vector<1x48x1xi1> to vector<1x48x1xi1>
    %10 = vector.broadcast %9 : vector<1x48x1xi1> to vector<1x48x32xi1>
    %11 = vector.broadcast %cst_4 : f32 to vector<1x48x32xf32>
    %12 = arith.select %10, %5, %11 : vector<1x48x32xi1>, vector<1x48x32xf32>
    %cst_5 = arith.constant dense<0xFF800000> : vector<1x32xf32>
    %13 = vector.multi_reduction <maximumf>, %12, %cst_5 [1] : vector<1x48x32xf32> to vector<1x32xf32>
    %c23_i32_6 = arith.constant 23 : i32
    %14 = vector.broadcast %c23_i32_6 : i32 to vector<1x48x1xi32>
    %15 = arith.cmpi sge, %6, %14 : vector<1x48x1xi32>
    %c46_i32 = arith.constant 46 : i32
    %16 = vector.broadcast %c46_i32 : i32 to vector<1x48x1xi32>
    %17 = arith.cmpi slt, %6, %16 : vector<1x48x1xi32>
    %18 = arith.andi %15, %17 : vector<1x48x1xi1>
    %cst_7 = arith.constant 0.000000e+00 : f32
    %19 = vector.shape_cast %18 : vector<1x48x1xi1> to vector<1x48x1xi1>
    %20 = vector.broadcast %19 : vector<1x48x1xi1> to vector<1x48x32xi1>
    %21 = vector.broadcast %cst_7 : f32 to vector<1x48x32xf32>
    %22 = arith.select %20, %5, %21 : vector<1x48x32xi1>, vector<1x48x32xf32>
    %cst_8 = arith.constant dense<0xFF800000> : vector<1x32xf32>
    %23 = vector.multi_reduction <maximumf>, %22, %cst_8 [1] : vector<1x48x32xf32> to vector<1x32xf32>
    %cst_9 = arith.constant 1.000000e+00 : f32
    %24 = vector.broadcast %cst_9 : f32 to vector<1x1xf32>
    %25 = tpu.concatenate %13, %23, %24 in 1 : vector<1x32xf32>, vector<1x32xf32>, vector<1x1xf32> -> vector<1x65xf32>
    %c0_10 = arith.constant 0 : index
    %c0_11 = arith.constant 0 : index
    %26 = vector.load %arg3[%c0_10, %c0_11] : memref<65x100xf32, #tpu.memory_space<vmem>>, vector<65x100xf32>
    %cst_12 = arith.constant dense<0.000000e+00> : vector<1x100xf32>
    %27 = tpu.matmul %25, %26, %cst_12 {dimension_numbers = #tpu.dot_dimension_numbers<[1], [0], [0], [1], [0, 0, 1, 1], [], []>} : vector<1x65xf32>, vector<65x100xf32>, vector<1x100xf32> -> vector<1x100xf32>
    %cst_13 = arith.constant 0.000000e+00 : f32
    %28 = vector.broadcast %cst_13 : f32 to vector<1x100xf32>
    %29 = arith.maximumf %27, %28 : vector<1x100xf32>
    %c0_14 = arith.constant 0 : index
    %c0_15 = arith.constant 0 : index
    %30 = vector.load %arg4[%c0_14, %c0_15] : memref<100x3xf32, #tpu.memory_space<vmem>>, vector<100x3xf32>
    %cst_16 = arith.constant dense<0.000000e+00> : vector<1x3xf32>
    %31 = tpu.matmul %29, %30, %cst_16 {dimension_numbers = #tpu.dot_dimension_numbers<[1], [0], [0], [1], [0, 0, 1, 1], [], []>} : vector<1x100xf32>, vector<100x3xf32>, vector<1x3xf32> -> vector<1x3xf32>
    %c0_17 = arith.constant 0 : index
    %c0_18 = arith.constant 0 : index
    %32 = vector.load %arg5[%c0_17, %c0_18] : memref<1x3xf32, #tpu.memory_space<vmem>>, vector<1x3xf32>
    %33 = arith.addf %31, %32 : vector<1x3xf32>
    %cst_19 = arith.constant dense<0xFF800000> : vector<1xf32>
    %34 = vector.multi_reduction <maximumf>, %33, %cst_19 [1] : vector<1x3xf32> to vector<1xf32>
    %35 = vector.shape_cast %34 : vector<1xf32> to vector<1x1xf32>
    %36 = vector.broadcast %35 : vector<1x1xf32> to vector<1x3xf32>
    %37 = arith.subf %33, %36 : vector<1x3xf32>
    %38 = math.exp %37 : vector<1x3xf32>
    %cst_20 = arith.constant dense<0.000000e+00> : vector<1xf32>
    %39 = vector.multi_reduction <add>, %38, %cst_20 [1] : vector<1x3xf32> to vector<1xf32>
    %40 = vector.shape_cast %39 : vector<1xf32> to vector<1x1xf32>
    %41 = tpu.reciprocal %40 {approx = true} : vector<1x1xf32> -> vector<1x1xf32>
    %42 = arith.mulf %40, %41 : vector<1x1xf32>
    %cst_21 = arith.constant 2.000000e+00 : f32
    %43 = vector.broadcast %cst_21 : f32 to vector<1x1xf32>
    %44 = arith.subf %43, %42 : vector<1x1xf32>
    %45 = arith.mulf %41, %44 : vector<1x1xf32>
    %46 = vector.broadcast %45 : vector<1x1xf32> to vector<1x3xf32>
    %47 = arith.mulf %38, %46 : vector<1x3xf32>
    %c0_22 = arith.constant 0 : index
    %c0_23 = arith.constant 0 : index
    %c0_24 = arith.constant 0 : index
    %48 = vector.load %arg6[%c0_22, %c0_23, %c0_24] : memref<1x1x3xf32, #tpu.memory_space<vmem>>, vector<1x1x3xf32>
    %49 = vector.shape_cast %48 : vector<1x1x3xf32> to vector<1x3xf32>
    %50 = vector.shape_cast %47 : vector<1x3xf32> to vector<1x1x3xf32>
    tpu.vector_store %arg6[%c0_22, %c0_23, %c0_24], %50 {strides = array<i32>} : memref<1x1x3xf32, #tpu.memory_space<vmem>>, vector<1x1x3xf32>,
    return
  }
  func.func @transform_0(%arg0: i32) -> (i32, i32) {
    %c0_i32 = arith.constant 0 : i32
    %c0_i32_0 = arith.constant 0 : i32
    return %arg0, %c0_i32 : i32, i32
  }
  func.func @transform_1(%arg0: i32) -> (i32, i32) {
    %c0_i32 = arith.constant 0 : i32
    %c0_i32_0 = arith.constant 0 : i32
    %c0_i32_1 = arith.constant 0 : i32
    return %c0_i32, %c0_i32_0 : i32, i32
  }
  func.func @transform_2(%arg0: i32) -> (i32, i32) {
    %c0_i32 = arith.constant 0 : i32
    %c0_i32_0 = arith.constant 0 : i32
    %c0_i32_1 = arith.constant 0 : i32
    return %c0_i32, %c0_i32_0 : i32, i32
  }
  func.func @transform_3(%arg0: i32) -> (i32, i32) {
    %c0_i32 = arith.constant 0 : i32
    %c0_i32_0 = arith.constant 0 : i32
    %c0_i32_1 = arith.constant 0 : i32
    return %c0_i32, %c0_i32_0 : i32, i32
  }
  func.func @transform_4(%arg0: i32) -> (i32, i32) {
    %c0_i32 = arith.constant 0 : i32
    %c0_i32_0 = arith.constant 0 : i32
    %c0_i32_1 = arith.constant 0 : i32
    return %c0_i32, %c0_i32_0 : i32, i32
  }
  func.func @transform_5(%arg0: i32) -> (i32, i32, i32) {
    %c0_i32 = arith.constant 0 : i32
    %c0_i32_0 = arith.constant 0 : i32
    %c0_i32_1 = arith.constant 0 : i32
    return %arg0, %c0_i32, %c0_i32_0 : i32, i32, i32
  }
}

</mosaic_0001>

<llo_original>
// kernel: backchanneler_forward_pallas.1
$region0: #{backchanneler_forward_pallas.1}
  #allocation0 [shape = 'u32[]', space=smem, size = 0x4, offset = 0x4, fixed_abs, tag = 'smem constant byte address 0x4 - core index']
  #allocation1 [shape = 'u32[144,128]{1,0:T(1,128)}', space=vmem, size = 0x12000, scoped, tag = 'internal scratch']
  %s0 = inlined_call_operand.vmem [shape: f32[96,157], index: 0, kind: input, shape index: {}]
  %s1 = inlined_call_operand.vmem [shape: f32[157,32], index: 1, kind: input, shape index: {}]
  %s2 = inlined_call_operand.vmem [shape: f32[65,100], index: 2, kind: input, shape index: {}]
  %s3 = inlined_call_operand.vmem [shape: f32[100,3], index: 3, kind: input, shape index: {}]
  %s4 = inlined_call_operand.vmem [shape: f32[1,3], index: 4, kind: input, shape index: {}]
  %s5 = inlined_call_operand.hbm [shape: f32[2,1,3], index: 5, kind: output, shape index: {}]
  %s6 = sld [smem:[#allocation0]]
  $region53: #{backchanneler_forward_pallas.1} parent=0
    _
  %s8 = ssub.s32 1, %s6
  %s9 = scalar_select 0, %s8, %s6
  $region1: #{backchanneler_forward_pallas.1} parent=0
    #allocation2 [shape = 'u8[1024]{0}', space=vmem, size = 0x400, scoped, tag = 'output window, operand 0']
    #allocation3 [shape = 's32[2]{0}', space=sflag, size = 0x8, scoped, tag = 'scoped memory for backchanneler_forward_pallas.1']
    %10 = vsyncpa [#allocation3], 0
    %s11 = scalar_lea.sflag [#allocation3], 1
    %12 = vsyncpa %s11, 0
    loop: start=0, step=1, limit=4
    $region2: #{backchanneler_forward_pallas.1} parent=1 // loop_pre_header
      _
    $region3: #{backchanneler_forward_pallas.1} parent=1 // loop_header
      %s14 = sphi 0, %s18
      %p15 = scmp.ge.s32.totalorder %s14, 4
      %s24 = sphi 0, %s26
      %s27 = sphi 0, %s24
      %s28 = sphi 0, %s27
      %s44 = sphi 0, %s28
      %s48 = sphi 0, %s48
      %s50 = sphi 0, %s48
      %s51 = sphi 0, %s50
      %s65 = sphi 0, %s51
      %s69 = sphi 0, %s69
      %s71 = sphi 0, %s69
      %s72 = sphi 0, %s71
      %s86 = sphi 0, %s72
      %s90 = sphi 0, %s90
      %s92 = sphi 0, %s90
      %s93 = sphi 0, %s92
      %s107 = sphi 0, %s93
      %s111 = sphi 0, %s111
      %s113 = sphi 0, %s111
      %s114 = sphi 0, %s113
      %s128 = sphi 0, %s114
      %s134 = sphi 0, %s136
      %s137 = sphi 0, %s134
      %s138 = sphi 0, %s137
      %s154 = sphi 0, %s138
    $region4: #{backchanneler_forward_pallas.1} parent=1 // loop_header_branch
      %17 = sbr.rel (%p15) target = $region8
    $region5: #{backchanneler_forward_pallas.1} parent=1 // loop_body
      %s19 = ssub.s32 %s14, 1
      %s20 = ssub.s32 %s14, 2
      %s21 = sadd.s32 %s14, 1
      %s22 = ssub.s32 %s14, %s21
      %p23 = scmp.eq.s32.totalorder %s22, 0
      %s25 = sadd.s32 %s24, 1
      %s26 = scalar_select %p23, %s24, %s25
      %p29 = pneg %p23
      %p30 = scmp.eq.s32.totalorder %s14, 1
      %p31 = por %p29, %p30
      %p32 = scmp.ne.s32.totalorder %s24, %s27
      %p33 = scmp.eq.s32.totalorder %s14, 0
      %p34 = por %p32, %p33
      %p35 = scmp.ne.s32.totalorder %s24, %s27
      %p36 = scmp.eq.s32.totalorder %s19, 1
      %p37 = por %p35, %p36
      %p38 = scmp.ne.s32.totalorder %s27, %s28
      %p39 = scmp.eq.s32.totalorder %s19, 0
      %p40 = por %p38, %p39
      %p41 = scmp.ne.s32.totalorder %s27, %s28
      %p42 = scmp.eq.s32.totalorder %s20, 1
      %p43 = por %p41, %p42
      %p45 = scmp.ne.s32.totalorder %s28, %s44
      %p46 = scmp.eq.s32.totalorder %s20, 0
      %p47 = por %p45, %p46
      %s49 = sadd.s32 %s48, 1
      %p52 = scmp.eq.s32.totalorder %s14, 1
      %p53 = scmp.ne.s32.totalorder %s48, %s50
      %p54 = scmp.eq.s32.totalorder %s14, 0
      %p55 = por %p53, %p54
      %p56 = scmp.ne.s32.totalorder %s48, %s50
      %p57 = scmp.eq.s32.totalorder %s19, 1
      %p58 = por %p56, %p57
      %p59 = scmp.ne.s32.totalorder %s50, %s51
      %p60 = scmp.eq.s32.totalorder %s19, 0
      %p61 = por %p59, %p60
      %p62 = scmp.ne.s32.totalorder %s50, %s51
      %p63 = scmp.eq.s32.totalorder %s20, 1
      %p64 = por %p62, %p63
      %p66 = scmp.ne.s32.totalorder %s51, %s65
      %p67 = scmp.eq.s32.totalorder %s20, 0
      %p68 = por %p66, %p67
      %s70 = sadd.s32 %s69, 1
      %p73 = scmp.eq.s32.totalorder %s14, 1
      %p74 = scmp.ne.s32.totalorder %s69, %s71
      %p75 = scmp.eq.s32.totalorder %s14, 0
      %p76 = por %p74, %p75
      %p77 = scmp.ne.s32.totalorder %s69, %s71
      %p78 = scmp.eq.s32.totalorder %s19, 1
      %p79 = por %p77, %p78
      %p80 = scmp.ne.s32.totalorder %s71, %s72
      %p81 = scmp.eq.s32.totalorder %s19, 0
      %p82 = por %p80, %p81
      %p83 = scmp.ne.s32.totalorder %s71, %s72
      %p84 = scmp.eq.s32.totalorder %s20, 1
      %p85 = por %p83, %p84
      %p87 = scmp.ne.s32.totalorder %s72, %s86
      %p88 = scmp.eq.s32.totalorder %s20, 0
      %p89 = por %p87, %p88
      %s91 = sadd.s32 %s90, 1
      %p94 = scmp.eq.s32.totalorder %s14, 1
      %p95 = scmp.ne.s32.totalorder %s90, %s92
      %p96 = scmp.eq.s32.totalorder %s14, 0
      %p97 = por %p95, %p96
      %p98 = scmp.ne.s32.totalorder %s90, %s92
      %p99 = scmp.eq.s32.totalorder %s19, 1
      %p100 = por %p98, %p99
      %p101 = scmp.ne.s32.totalorder %s92, %s93
      %p102 = scmp.eq.s32.totalorder %s19, 0
      %p103 = por %p101, %p102
      %p104 = scmp.ne.s32.totalorder %s92, %s93
      %p105 = scmp.eq.s32.totalorder %s20, 1
      %p106 = por %p104, %p105
      %p108 = scmp.ne.s32.totalorder %s93, %s107
      %p109 = scmp.eq.s32.totalorder %s20, 0
      %p110 = por %p108, %p109
      %s112 = sadd.s32 %s111, 1
      %p115 = scmp.eq.s32.totalorder %s14, 1
      %p116 = scmp.ne.s32.totalorder %s111, %s113
      %p117 = scmp.eq.s32.totalorder %s14, 0
      %p118 = por %p116, %p117
      %p119 = scmp.ne.s32.totalorder %s111, %s113
      %p120 = scmp.eq.s32.totalorder %s19, 1
      %p121 = por %p119, %p120
      %p122 = scmp.ne.s32.totalorder %s113, %s114
      %p123 = scmp.eq.s32.totalorder %s19, 0
      %p124 = por %p122, %p123
      %p125 = scmp.ne.s32.totalorder %s113, %s114
      %p126 = scmp.eq.s32.totalorder %s20, 1
      %p127 = por %p125, %p126
      %p129 = scmp.ne.s32.totalorder %s114, %s128
      %p130 = scmp.eq.s32.totalorder %s20, 0
      %p131 = por %p129, %p130
      %s132 = ssub.s32 %s14, %s21
      %p133 = scmp.eq.s32.totalorder %s132, 0
      %s135 = sadd.s32 %s134, 1
      %s136 = scalar_select %p133, %s134, %s135
      %p139 = pneg %p133
      %p140 = scmp.eq.s32.totalorder %s14, 1
      %p141 = por %p139, %p140
      %p142 = scmp.ne.s32.totalorder %s134, %s137
      %p143 = scmp.eq.s32.totalorder %s14, 0
      %p144 = por %p142, %p143
      %p145 = scmp.ne.s32.totalorder %s134, %s137
      %p146 = scmp.eq.s32.totalorder %s19, 1
      %p147 = por %p145, %p146
      %p148 = scmp.ne.s32.totalorder %s137, %s138
      %p149 = scmp.eq.s32.totalorder %s19, 0
      %p150 = por %p148, %p149
      %p151 = scmp.ne.s32.totalorder %s137, %s138
      %p152 = scmp.eq.s32.totalorder %s20, 1
      %p153 = por %p151, %p152
      %p155 = scmp.ne.s32.totalorder %s138, %s154
      %p156 = scmp.eq.s32.totalorder %s20, 0
      %p157 = por %p155, %p156
      %p158 = scmp.le.s32.totalorder 1, %s14
      %p159 = scmp.lt.s32.totalorder %s14, 3
      %p160 = pnand %p158, %p159
      %p161 = pneg %p160
      // Predicated region
      $region9: #{backchanneler_forward_pallas.1} parent=5 // pred_check
        _
      $region10: #{backchanneler_forward_pallas.1} parent=5 // pred_check_branch
        %163 = sbr.rel (%p160) target = $region12
      $region11: #{backchanneler_forward_pallas.1} parent=5 // pred_region
        %s164 = ssub.s32 %s14, 1
        // Predicated region
        $region13: #{backchanneler_forward_pallas.1} parent=11 // pred_check
          %p165 = pneg %p61
        $region14: #{backchanneler_forward_pallas.1} parent=11 // pred_check_branch
          %167 = sbr.rel (%p165) target = $region16
        $region15: #{backchanneler_forward_pallas.1} parent=11 // pred_region
          _
        $region16: #{backchanneler_forward_pallas.1} parent=11 // pred_fallthru
          _
        // Predicated region
        $region17: #{backchanneler_forward_pallas.1} parent=11 // pred_check
          %p168 = pneg %p82
        $region18: #{backchanneler_forward_pallas.1} parent=11 // pred_check_branch
          %170 = sbr.rel (%p168) target = $region20
        $region19: #{backchanneler_forward_pallas.1} parent=11 // pred_region
          _
        $region20: #{backchanneler_forward_pallas.1} parent=11 // pred_fallthru
          _
        // Predicated region
        $region21: #{backchanneler_forward_pallas.1} parent=11 // pred_check
          %p171 = pneg %p103
        $region22: #{backchanneler_forward_pallas.1} parent=11 // pred_check_branch
          %173 = sbr.rel (%p171) target = $region24
        $region23: #{backchanneler_forward_pallas.1} parent=11 // pred_region
          _
        $region24: #{backchanneler_forward_pallas.1} parent=11 // pred_fallthru
          _
        // Predicated region
        $region25: #{backchanneler_forward_pallas.1} parent=11 // pred_check
          %p174 = pneg %p124
        $region26: #{backchanneler_forward_pallas.1} parent=11 // pred_check_branch
          %176 = sbr.rel (%p174) target = $region28
        $region27: #{backchanneler_forward_pallas.1} parent=11 // pred_region
          _
        $region28: #{backchanneler_forward_pallas.1} parent=11 // pred_fallthru
          _
      $region12: #{backchanneler_forward_pallas.1} parent=5 // pred_fallthru
        _
      %p177 = scmp.lt.s32.totalorder %s14, 2
      // Predicated region
      $region29: #{backchanneler_forward_pallas.1} parent=5 // pred_check
        %p178 = pneg %p177
      $region30: #{backchanneler_forward_pallas.1} parent=5 // pred_check_branch
        %180 = sbr.rel (%p178) target = $region32
      $region31: #{backchanneler_forward_pallas.1} parent=5 // pred_region
        // Predicated region
        $region33: #{backchanneler_forward_pallas.1} parent=31 // pred_check
          %p181 = pneg %p34
        $region34: #{backchanneler_forward_pallas.1} parent=31 // pred_check_branch
          %183 = sbr.rel (%p181) target = $region36
        $region35: #{backchanneler_forward_pallas.1} parent=31 // pred_region
          %s184 = smul.u32 6, %s14
          %p185 = scmp.lt.s32.totalorder %s184, 11
          %s186 = scalar_select %p185, %s184, 11
          %s187 = smul.addr %s186, 2
          %s188 = smul.addr %s187, 8
          %s189 = scalar_lea.vmem %s0, %s188
          %s190 = smul.u32 6, %s14
        $region36: #{backchanneler_forward_pallas.1} parent=31 // pred_fallthru
          _
      $region32: #{backchanneler_forward_pallas.1} parent=5 // pred_fallthru
        _
      %p191 = scmp.le.s32.totalorder 1, %s14
      %p192 = scmp.lt.s32.totalorder %s14, 3
      %p193 = pnand %p191, %p192
      %p194 = pneg %p193
      // Predicated region
      $region37: #{backchanneler_forward_pallas.1} parent=5 // pred_check
        _
      $region38: #{backchanneler_forward_pallas.1} parent=5 // pred_check_branch
        %196 = sbr.rel (%p193) target = $region40
      $region39: #{backchanneler_forward_pallas.1} parent=5 // pred_region
        %s197 = ssub.s32 %s14, 1
        %s198 = smul.u32 6, %s19
        %p199 = scmp.lt.s32.totalorder %s198, 11
        %s200 = scalar_select %p199, %s198, 11
        %s201 = smul.addr %s200, 2
        %s202 = smul.addr %s201, 8
        %s203 = scalar_lea.vmem %s0, %s202
        %p204 = pneg %p40
        %p205 = pneg %p37
        %p206 = pneg %p61
        %p207 = pneg %p58
        %p208 = pneg %p82
        %p209 = pneg %p79
        %p210 = pneg %p103
        %p211 = pneg %p100
        %p212 = pneg %p124
        %p213 = pneg %p121
        %p214 = pneg %p150
        %p215 = pneg %p147
        %s216 = sand.u32 %s137, 1
        %s217 = scalar_lea.sflag [#allocation3], %s216
        %s218 = sand.u32 %s137, 1
        %s219 = scalar_lea.vmem [#allocation2], %s218
        %s220 = smul.u32 6, %s19
        %p221 = scmp.lt.s32.totalorder %s220, 11
        %s222 = scalar_select %p221, %s220, 11
        %s223 = smul.addr %s222, 2
        %s224 = smul.addr %s223, 8
        %s225 = scalar_lea.vmem %s0, %s224
        %s226 = smul.u32 6, %s19
        %v227 = vld [vmem:[%s225] sm:$0xff]
        %v228 = vld [vmem:[%s225 + $0x8] sm:$0xff]
        %v229 = vld [vmem:[%s225 + $0x10] sm:$0xff]
        %v230 = vld [vmem:[%s225 + $0x18] sm:$0xff]
        %v231 = vld [vmem:[%s225 + $0x20] sm:$0xff]
        %v232 = vld [vmem:[%s225 + $0x28] sm:$0xff]
        %v233 = vld [vmem:[%s225 + $0x30] sm:$0xff]
        %v234 = vld [vmem:[%s225 + $0x38] sm:$0xff]
        %v235 = vld [vmem:[%s225 + $0x40] sm:$0xff]
        %v236 = vld [vmem:[%s225 + $0x48] sm:$0xff]
        %v237 = vld [vmem:[%s225 + $0x50] sm:$0xff]
        %v238 = vld [vmem:[%s225 + $0x58] sm:$0xff]
        %v239 = vld [vmem:[%s1] sm:$0xff]
        %v240 = vld [vmem:[%s1 + $0x8] sm:$0xff]
        %v241 = vld [vmem:[%s1 + $0x10] sm:$0xff]
        %v242 = vld [vmem:[%s1 + $0x18] sm:$0xff]
        %v243 = vld [vmem:[%s1 + $0x20] sm:$0xff]
        %v244 = vld [vmem:[%s1 + $0x28] sm:$0xff]
        %v245 = vld [vmem:[%s1 + $0x30] sm:$0xff]
        %v246 = vld [vmem:[%s1 + $0x38] sm:$0xff]
        %v247 = vld [vmem:[%s1 + $0x40] sm:$0xff]
        %v248 = vld [vmem:[%s1 + $0x48] sm:$0xff]
        %v249 = vld [vmem:[%s1 + $0x50] sm:$0xff]
        %v250 = vld [vmem:[%s1 + $0x58] sm:$0xff]
        %v251 = vld [vmem:[%s1 + $0x60] sm:$0xff]
        %v252 = vld [vmem:[%s1 + $0x68] sm:$0xff]
        %v253 = vld [vmem:[%s1 + $0x70] sm:$0xff]
        %v254 = vld [vmem:[%s1 + $0x78] sm:$0xff]
        %v255 = vld [vmem:[%s1 + $0x80] sm:$0xff]
        %v256 = vld [vmem:[%s1 + $0x88] sm:$0xff]
        %v257 = vld [vmem:[%s1 + $0x90] sm:$0xff]
        %v258 = vld [vmem:[%s1 + $0x98] sm:$0x1f]
        %vm259 = vcmask 236544
        %v261 = vsel %vm259, %v228, 0
        %v264 = vsel %vm259, %v230, 0
        %v267 = vsel %vm259, %v232, 0
        %v270 = vsel %vm259, %v234, 0
        %v273 = vsel %vm259, %v236, 0
        %v276 = vsel %vm259, %v238, 0
        %vm278 = vcmask 1044480
        %v280 = vsel %vm278, %v258, 0
        %282 = vmatprep.subr.mxu0 0.0
        %283 = vmatpush1.msra.mxu0 %v254
        %284 = vmatprep.subr.mxu0 0.0
        %285 = vmatpush1.msra.mxu0 %v253
        %286 = vmatprep.subr.mxu0 0.0
        %287 = vmatpush1.msra.mxu0 %v252
        %288 = vmatprep.subr.mxu0 0.0
        %289 = vmatpush1.msra.mxu0 %v251
        %290 = vmatprep.subr.mxu0 0.0
        %291 = vmatpush1.msra.mxu0 %v250
        %292 = vmatprep.subr.mxu0 0.0
        %293 = vmatpush1.msra.mxu0 %v249
        %294 = vmatprep.subr.mxu0 0.0
        %295 = vmatpush1.msra.mxu0 %v248
        %296 = vmatprep.subr.mxu0 0.0
        %297 = vmatpush1.msra.mxu0 %v247
        %298 = vmatprep.subr.mxu0 0.0
        %299 = vmatpush1.msra.mxu0 %v246
        %300 = vmatprep.subr.mxu0 0.0
        %301 = vmatpush1.msra.mxu0 %v245
        %302 = vmatprep.subr.mxu0 0.0
        %303 = vmatpush1.msra.mxu0 %v244
        %304 = vmatprep.subr.mxu0 0.0
        %305 = vmatpush1.msra.mxu0 %v243
        %306 = vmatprep.subr.mxu0 0.0
        %307 = vmatpush1.msra.mxu0 %v242
        %308 = vmatprep.subr.mxu0 0.0
        %309 = vmatpush1.msra.mxu0 %v241
        %310 = vmatprep.subr.mxu0 0.0
        %311 = vmatpush1.msra.mxu0 %v240
        %312 = vmatprep.subr.mxu0 0.0
        %313 = vmatpush1.msra.mxu0 %v239
        %314 = vmatprep.subr.mxu0 0.0
        %315 = vmatpush2.msra.mxu0 0.0
        %316 = vmatprep.subr.mxu0 0.0
        %317 = vmatpush2.msra.mxu0 0.0
        %318 = vmatprep.subr.mxu0 0.0
        %319 = vmatpush2.msra.mxu0 0.0
        %320 = vmatprep.subr.mxu0 0.0
        %321 = vmatpush2.msra.mxu0 0.0
        %322 = vmatprep.subr.mxu0 0.0
        %323 = vmatpush2.msra.mxu0 0.0
        %324 = vmatprep.subr.mxu0 0.0
        %325 = vmatpush2.msra.mxu0 0.0
        %326 = vmatprep.subr.mxu0 0.0
        %327 = vmatpush2.msra.mxu0 0.0
        %328 = vmatprep.subr.mxu0 0.0
        %329 = vmatpush2.msra.mxu0 0.0
        %330 = vmatprep.subr.mxu0 0.0
        %331 = vmatpush2.msra.mxu0 0.0
        %332 = vmatprep.subr.mxu0 0.0
        %333 = vmatpush2.msra.mxu0 0.0
        %334 = vmatprep.subr.mxu0 0.0
        %335 = vmatpush2.msra.mxu0 0.0
        %336 = vmatprep.subr.mxu0 0.0
        %337 = vmatpush2.msra.mxu0 0.0
        %338 = vmatprep.subr.mxu0 0.0
        %339 = vmatpush2.msra.mxu0 %v280
        %340 = vmatprep.subr.mxu0 0.0
        %341 = vmatpush2.msra.mxu0 %v257
        %342 = vmatprep.subr.mxu0 0.0
        %343 = vmatpush2.msra.mxu0 %v256
        %344 = vmatprep.subr.mxu0 0.0
        %345 = vmatpush2.msra.mxu0 %v255
        %346 = vmatprep.mubr.f32.mxu0 %v261
        %347 = vmatmul.mubr.f32.gmra.mxu0 %v227
        %v348 = vpop.f32.mrf.mxu0
        %v349 = vadd.f32 0.0, %v348
        %v350 = vpop.f32.mrf.mxu0
        %351 = vmatprep.mubr.f32.mxu0 %v264
        %352 = vmatmul.mubr.f32.gmra.mxu0 %v229
        %v353 = vpop.f32.mrf.mxu0
        %v354 = vadd.f32 0.0, %v353
        %v355 = vpop.f32.mrf.mxu0
        %356 = vmatprep.mubr.f32.mxu0 %v267
        %357 = vmatmul.mubr.f32.gmra.mxu0 %v231
        %v358 = vpop.f32.mrf.mxu0
        %v359 = vadd.f32 0.0, %v358
        %v360 = vpop.f32.mrf.mxu0
        %361 = vmatprep.mubr.f32.mxu0 %v270
        %362 = vmatmul.mubr.f32.gmra.mxu0 %v233
        %v363 = vpop.f32.mrf.mxu0
        %v364 = vadd.f32 0.0, %v363
        %v365 = vpop.f32.mrf.mxu0
        %366 = vmatprep.mubr.f32.mxu0 %v273
        %367 = vmatmul.mubr.f32.gmra.mxu0 %v235
        %v368 = vpop.f32.mrf.mxu0
        %v369 = vadd.f32 0.0, %v368
        %v370 = vpop.f32.mrf.mxu0
        %371 = vmatprep.mubr.f32.mxu0 %v276
        %372 = vmatmul.mubr.f32.gmra.mxu0 %v237
        %v373 = vpop.f32.mrf.mxu0
        %v374 = vadd.f32 0.0, %v373
        %v375 = vpop.f32.mrf.mxu0
        %376 = vdwg.mxu0
        %v377 = vmax.f32 %v349, 0.0
        %v378 = vmax.f32 %v354, 0.0
        %v379 = vmax.f32 %v359, 0.0
        %v380 = vmax.f32 %v364, 0.0
        %v381 = vmax.f32 %v369, 0.0
        %v382 = vmax.f32 %v374, 0.0
        %v383 = vlaneseq
        %v384 = vshrl.u32 %v383, 7
        %v385 = vadd.s32 %v384, 8
        %v386 = vadd.s32 %v384, 16
        %v387 = vadd.s32 %v384, 24
        %v388 = vadd.s32 %v384, 32
        %v389 = vadd.s32 %v384, 40
        %vm390 = vcmp.lt.s32.totalorder %v384, 23
        %vm391 = vcmp.lt.s32.totalorder %v385, 23
        %vm392 = vcmp.lt.s32.totalorder %v386, 23
        %vm393 = vcmp.lt.s32.totalorder %v387, 23
        %vm394 = vcmp.lt.s32.totalorder %v388, 23
        %vm395 = vcmp.lt.s32.totalorder %v389, 23
        %v396 = vsel %vm390, 1, 0
        %v397 = vsel %vm391, 1, 0
        %v398 = vsel %vm392, 1, 0
        %v399 = vsel %vm393, 1, 0
        %v400 = vsel %vm394, 1, 0
        %v401 = vsel %vm395, 1, 0
        %vm402 = vcmp.eq.s32.totalorder %v396, 1
        %vm403 = vcmp.eq.s32.totalorder %v397, 1
        %vm404 = vcmp.eq.s32.totalorder %v398, 1
        %vm405 = vcmp.eq.s32.totalorder %v399, 1
        %vm406 = vcmp.eq.s32.totalorder %v400, 1
        %vm407 = vcmp.eq.s32.totalorder %v401, 1
        %v408 = vsel %vm402, %v377, 0.0
        %v409 = vsel %vm403, %v378, 0.0
        %v410 = vsel %vm404, %v379, 0.0
        %v411 = vsel %vm405, %v380, 0.0
        %v412 = vsel %vm406, %v381, 0.0
        %v413 = vsel %vm407, %v382, 0.0
        %vm414 = vcmask 261120
        %v415 = vsel %vm414, %v408, -inf
        %v416 = vsel %vm414, %v409, -inf
        %v417 = vsel %vm414, %v410, -inf
        %v418 = vsel %vm414, %v411, -inf
        %v419 = vsel %vm414, %v412, -inf
        %v420 = vmax.f32 %v415, %v419
        %v421 = vsel %vm414, %v413, -inf
        %v422 = vmax.f32 %v416, %v421
        %v423 = vmax.f32 %v420, %v422
        %v424 = vmax.f32 %v417, %v418
        %v425 = vmax.f32 %v423, %v424
        %v426 = vrot.slane %v425, 4
        %v427 = vmax.f32 %v425, %v426
        %v428 = vrot.slane %v427, 2
        %v429 = vmax.f32 %v427, %v428
        %v430 = vrot.slane %v429, 1
        %v431 = vmax.f32 %v429, %v430
        %vm432 = vcmp.ge.s32.totalorder %v384, 23
        %vm433 = vcmp.ge.s32.totalorder %v385, 23
        %vm434 = vcmp.ge.s32.totalorder %v386, 23
        %vm435 = vcmp.ge.s32.totalorder %v387, 23
        %vm436 = vcmp.ge.s32.totalorder %v388, 23
        %vm437 = vcmp.ge.s32.totalorder %v389, 23
        %vm438 = vcmp.lt.s32.totalorder %v384, 46
        %vm439 = vcmp.lt.s32.totalorder %v385, 46
        %vm440 = vcmp.lt.s32.totalorder %v386, 46
        %vm441 = vcmp.lt.s32.totalorder %v387, 46
        %vm442 = vcmp.lt.s32.totalorder %v388, 46
        %vm443 = vcmp.lt.s32.totalorder %v389, 46
        %vm444 = vmand %vm432, %vm438
        %vm445 = vmand %vm433, %vm439
        %vm446 = vmand %vm434, %vm440
        %vm447 = vmand %vm435, %vm441
        %vm448 = vmand %vm436, %vm442
        %vm449 = vmand %vm437, %vm443
        %v450 = vsel %vm444, 1, 0
        %v451 = vsel %vm445, 1, 0
        %v452 = vsel %vm446, 1, 0
        %v453 = vsel %vm447, 1, 0
        %v454 = vsel %vm448, 1, 0
        %v455 = vsel %vm449, 1, 0
        %vm456 = vcmp.eq.s32.totalorder %v450, 1
        %vm457 = vcmp.eq.s32.totalorder %v451, 1
        %vm458 = vcmp.eq.s32.totalorder %v452, 1
        %vm459 = vcmp.eq.s32.totalorder %v453, 1
        %vm460 = vcmp.eq.s32.totalorder %v454, 1
        %vm461 = vcmp.eq.s32.totalorder %v455, 1
        %v462 = vsel %vm456, %v377, 0.0
        %v463 = vsel %vm457, %v378, 0.0
        %v464 = vsel %vm458, %v379, 0.0
        %v465 = vsel %vm459, %v380, 0.0
        %v466 = vsel %vm460, %v381, 0.0
        %v467 = vsel %vm461, %v382, 0.0
        %v468 = vsel %vm414, %v462, -inf
        %v469 = vsel %vm414, %v463, -inf
        %v470 = vsel %vm414, %v464, -inf
        %v471 = vsel %vm414, %v465, -inf
        %v472 = vsel %vm414, %v466, -inf
        %v473 = vmax.f32 %v468, %v472
        %v474 = vsel %vm414, %v467, -inf
        %v475 = vmax.f32 %v469, %v474
        %v476 = vmax.f32 %v473, %v475
        %v477 = vmax.f32 %v470, %v471
        %v478 = vmax.f32 %v476, %v477
        %v479 = vrot.slane %v478, 4
        %v480 = vmax.f32 %v478, %v479
        %v481 = vrot.slane %v480, 2
        %v482 = vmax.f32 %v480, %v481
        %v483 = vrot.slane %v482, 1
        %v484 = vmax.f32 %v482, %v483
        %486 = vrot.lane.b32.xlu0 %v484, 32
        %v487 = vpop.permute.xlu0 %486
        %v489 = vsel %vm414, %v431, %v487
        %vm490 = vcmask 523264
        %v491 = vsel %vm490, %v489, 1.0
        %v492 = vld [vmem:[%s2] sm:$0xff]
        %v493 = vld [vmem:[%s2 + $0x8] sm:$0xff]
        %v494 = vld [vmem:[%s2 + $0x10] sm:$0xff]
        %v495 = vld [vmem:[%s2 + $0x18] sm:$0xff]
        %v496 = vld [vmem:[%s2 + $0x20] sm:$0xff]
        %v497 = vld [vmem:[%s2 + $0x28] sm:$0xff]
        %v498 = vld [vmem:[%s2 + $0x30] sm:$0xff]
        %v499 = vld [vmem:[%s2 + $0x38] sm:$0xff]
        %v500 = vld [vmem:[%s2 + $0x40] sm:$0x1]
        %vm501 = vcmask 531456
        %v503 = vsel %vm501, %v491, 0
        %vm505 = vcmask 1040384
        %v507 = vsel %vm505, %v500, 0
        %509 = vmatprep.subr.mxu0 0.0
        %510 = vmatpush1.msra.mxu0 0.0
        %511 = vmatprep.subr.mxu0 0.0
        %512 = vmatpush1.msra.mxu0 0.0
        %513 = vmatprep.subr.mxu0 0.0
        %514 = vmatpush1.msra.mxu0 0.0
        %515 = vmatprep.subr.mxu0 0.0
        %516 = vmatpush1.msra.mxu0 0.0
        %517 = vmatprep.subr.mxu0 0.0
        %518 = vmatpush1.msra.mxu0 0.0
        %519 = vmatprep.subr.mxu0 0.0
        %520 = vmatpush1.msra.mxu0 0.0
        %521 = vmatprep.subr.mxu0 0.0
        %522 = vmatpush1.msra.mxu0 0.0
        %523 = vmatprep.subr.mxu0 0.0
        %524 = vmatpush1.msra.mxu0 %v507
        %525 = vmatprep.subr.mxu0 0.0
        %526 = vmatpush1.msra.mxu0 %v499
        %527 = vmatprep.subr.mxu0 0.0
        %528 = vmatpush1.msra.mxu0 %v498
        %529 = vmatprep.subr.mxu0 0.0
        %530 = vmatpush1.msra.mxu0 %v497
        %531 = vmatprep.subr.mxu0 0.0
        %532 = vmatpush1.msra.mxu0 %v496
        %533 = vmatprep.subr.mxu0 0.0
        %534 = vmatpush1.msra.mxu0 %v495
        %535 = vmatprep.subr.mxu0 0.0
        %536 = vmatpush1.msra.mxu0 %v494
        %537 = vmatprep.subr.mxu0 0.0
        %538 = vmatpush1.msra.mxu0 %v493
        %539 = vmatprep.subr.mxu0 0.0
        %540 = vmatpush1.msra.mxu0 %v492
        %541 = vmatprep.subr.mxu0 0.0
        %542 = vmatpush2.msra.mxu0 0.0
        %543 = vmatprep.subr.mxu0 0.0
        %544 = vmatpush2.msra.mxu0 0.0
        %545 = vmatprep.subr.mxu0 0.0
        %546 = vmatpush2.msra.mxu0 0.0
        %547 = vmatprep.subr.mxu0 0.0
        %548 = vmatpush2.msra.mxu0 0.0
        %549 = vmatprep.subr.mxu0 0.0
        %550 = vmatpush2.msra.mxu0 0.0
        %551 = vmatprep.subr.mxu0 0.0
        %552 = vmatpush2.msra.mxu0 0.0
        %553 = vmatprep.subr.mxu0 0.0
        %554 = vmatpush2.msra.mxu0 0.0
        %555 = vmatprep.subr.mxu0 0.0
        %556 = vmatpush2.msra.mxu0 0.0
        %557 = vmatprep.subr.mxu0 0.0
        %558 = vmatpush2.msra.mxu0 0.0
        %559 = vmatprep.subr.mxu0 0.0
        %560 = vmatpush2.msra.mxu0 0.0
        %561 = vmatprep.subr.mxu0 0.0
        %562 = vmatpush2.msra.mxu0 0.0
        %563 = vmatprep.subr.mxu0 0.0
        %564 = vmatpush2.msra.mxu0 0.0
        %565 = vmatprep.subr.mxu0 0.0
        %566 = vmatpush2.msra.mxu0 0.0
        %567 = vmatprep.subr.mxu0 0.0
        %568 = vmatpush2.msra.mxu0 0.0
        %569 = vmatprep.subr.mxu0 0.0
        %570 = vmatpush2.msra.mxu0 0.0
        %571 = vmatprep.subr.mxu0 0.0
        %572 = vmatpush2.msra.mxu0 0.0
        %573 = vmatprep.mubr.f32.mxu0 0.0
        %574 = vmatmul.mubr.f32.gmra.mxu0 %v503
        %v575 = vpop.f32.mrf.mxu0
        %v576 = vadd.f32 0.0, %v575
        %v577 = vpop.f32.mrf.mxu0
        %578 = vdwg.mxu0
        %v579 = vmax.f32 %v576, 0.0
        %v580 = vld [vmem:[%s3] sm:$0xff]
        %v581 = vld [vmem:[%s3 + $0x8] sm:$0xff]
        %v582 = vld [vmem:[%s3 + $0x10] sm:$0xff]
        %v583 = vld [vmem:[%s3 + $0x18] sm:$0xff]
        %v584 = vld [vmem:[%s3 + $0x20] sm:$0xff]
        %v585 = vld [vmem:[%s3 + $0x28] sm:$0xff]
        %v586 = vld [vmem:[%s3 + $0x30] sm:$0xff]
        %v587 = vld [vmem:[%s3 + $0x38] sm:$0xff]
        %v588 = vld [vmem:[%s3 + $0x40] sm:$0xff]
        %v589 = vld [vmem:[%s3 + $0x48] sm:$0xff]
        %v590 = vld [vmem:[%s3 + $0x50] sm:$0xff]
        %v591 = vld [vmem:[%s3 + $0x58] sm:$0xff]
        %v592 = vld [vmem:[%s3 + $0x60] sm:$0xf]
        %v593 = vld [vmem:[%s4] sm:$0x1]
        %vm594 = vcmask 818176
        %v596 = vsel %vm594, %v579, 0
        %vm598 = vcmask 1043456
        %v600 = vsel %vm598, %v592, 0
        %602 = vmatprep.subr.mxu0 0.0
        %603 = vmatpush1.msra.mxu0 0.0
        %604 = vmatprep.subr.mxu0 0.0
        %605 = vmatpush1.msra.mxu0 0.0
        %606 = vmatprep.subr.mxu0 0.0
        %607 = vmatpush1.msra.mxu0 0.0
        %608 = vmatprep.subr.mxu0 0.0
        %609 = vmatpush1.msra.mxu0 %v600
        %610 = vmatprep.subr.mxu0 0.0
        %611 = vmatpush1.msra.mxu0 %v591
        %612 = vmatprep.subr.mxu0 0.0
        %613 = vmatpush1.msra.mxu0 %v590
        %614 = vmatprep.subr.mxu0 0.0
        %615 = vmatpush1.msra.mxu0 %v589
        %616 = vmatprep.subr.mxu0 0.0
        %617 = vmatpush1.msra.mxu0 %v588
        %618 = vmatprep.subr.mxu0 0.0
        %619 = vmatpush1.msra.mxu0 %v587
        %620 = vmatprep.subr.mxu0 0.0
        %621 = vmatpush1.msra.mxu0 %v586
        %622 = vmatprep.subr.mxu0 0.0
        %623 = vmatpush1.msra.mxu0 %v585
        %624 = vmatprep.subr.mxu0 0.0
        %625 = vmatpush1.msra.mxu0 %v584
        %626 = vmatprep.subr.mxu0 0.0
        %627 = vmatpush1.msra.mxu0 %v583
        %628 = vmatprep.subr.mxu0 0.0
        %629 = vmatpush1.msra.mxu0 %v582
        %630 = vmatprep.subr.mxu0 0.0
        %631 = vmatpush1.msra.mxu0 %v581
        %632 = vmatprep.subr.mxu0 0.0
        %633 = vmatpush1.msra.mxu0 %v580
        %634 = vmatprep.subr.mxu0 0.0
        %635 = vmatpush2.msra.mxu0 0.0
        %636 = vmatprep.subr.mxu0 0.0
        %637 = vmatpush2.msra.mxu0 0.0
        %638 = vmatprep.subr.mxu0 0.0
        %639 = vmatpush2.msra.mxu0 0.0
        %640 = vmatprep.subr.mxu0 0.0
        %641 = vmatpush2.msra.mxu0 0.0
        %642 = vmatprep.subr.mxu0 0.0
        %643 = vmatpush2.msra.mxu0 0.0
        %644 = vmatprep.subr.mxu0 0.0
        %645 = vmatpush2.msra.mxu0 0.0
        %646 = vmatprep.subr.mxu0 0.0
        %647 = vmatpush2.msra.mxu0 0.0
        %648 = vmatprep.subr.mxu0 0.0
        %649 = vmatpush2.msra.mxu0 0.0
        %650 = vmatprep.subr.mxu0 0.0
        %651 = vmatpush2.msra.mxu0 0.0
        %652 = vmatprep.subr.mxu0 0.0
        %653 = vmatpush2.msra.mxu0 0.0
        %654 = vmatprep.subr.mxu0 0.0
        %655 = vmatpush2.msra.mxu0 0.0
        %656 = vmatprep.subr.mxu0 0.0
        %657 = vmatpush2.msra.mxu0 0.0
        %658 = vmatprep.subr.mxu0 0.0
        %659 = vmatpush2.msra.mxu0 0.0
        %660 = vmatprep.subr.mxu0 0.0
        %661 = vmatpush2.msra.mxu0 0.0
        %662 = vmatprep.subr.mxu0 0.0
        %663 = vmatpush2.msra.mxu0 0.0
        %664 = vmatprep.subr.mxu0 0.0
        %665 = vmatpush2.msra.mxu0 0.0
        %666 = vmatprep.mubr.f32.mxu0 0.0
        %667 = vmatmul.mubr.f32.gmra.mxu0 %v596
        %v668 = vpop.f32.mrf.mxu0
        %v669 = vadd.f32 %v593, %v668
        %v670 = vpop.f32.mrf.mxu0
        %671 = vdwg.mxu0
        %vm672 = vcmask 16384
        %v673 = vsel %vm672, %v669, -inf
        %674 = vmax.xlane.f32.xlu0 %v673
        %v675 = vpop.xlane.xlu0 %674
        %v676 = vsub.f32 %v669, %v675
        %v677 = vmul.f32 %v676, 1.442695
        %v678 = vpow.pop %v677
        %v679 = vsel %vm672, %v678, 0.0
        %680 = vadd.xlane.f32.xlu0 %v679
        %v681 = vpop.xlane.xlu0 %680
        %v682 = vrcp.pop %v681
        %v683 = vmul.f32 %v681, %v682
        %v684 = vsub.f32 2.0, %v683
        %v685 = vmul.f32 %v682, %v684
        %v686 = vmul.f32 %v678, %v685
        %687 = vst.msk [vmem:[%s219] sm:$0x1] %vm672, %v686
        %s688 = sand.u32 %s137, 1
        %s689 = scalar_lea.sflag [#allocation3], %s688
        %s690 = sand.u32 %s137, 1
        %s691 = scalar_lea.vmem [#allocation2], %s690
        // Predicated region
        $region41: #{backchanneler_forward_pallas.1} parent=39 // pred_check
          %p692 = pneg %p147
        $region42: #{backchanneler_forward_pallas.1} parent=39 // pred_check_branch
          %694 = sbr.rel (%p692) target = $region44
        $region43: #{backchanneler_forward_pallas.1} parent=39 // pred_region
          %s696 = ssub.s32 16, 16
          %697 = vsyncadd %s689, %s696
          %s698 = smul.addr %s19, 16
          %s699 = scalar_lea.hbm %s5, %s698
          %s701 = sshll.u32 %s691, 4
          %s702 = int_to_ptr.vmem [resolvable:$true] %s701
          %704 = dma.vmem_to_hbm [thread:$0]  %s702, 16, %s699, %s689
        $region44: #{backchanneler_forward_pallas.1} parent=39 // pred_fallthru
          _
      $region40: #{backchanneler_forward_pallas.1} parent=5 // pred_fallthru
        _
      %p705 = scmp.le.s32.totalorder 2, %s14
      // Predicated region
      $region45: #{backchanneler_forward_pallas.1} parent=5 // pred_check
        %p706 = pneg %p705
      $region46: #{backchanneler_forward_pallas.1} parent=5 // pred_check_branch
        %708 = sbr.rel (%p706) target = $region48
      $region47: #{backchanneler_forward_pallas.1} parent=5 // pred_region
        %s709 = ssub.s32 %s14, 2
        // Predicated region
        $region49: #{backchanneler_forward_pallas.1} parent=47 // pred_check
          %p710 = pneg %p153
        $region50: #{backchanneler_forward_pallas.1} parent=47 // pred_check_branch
          %712 = sbr.rel (%p710) target = $region52
        $region51: #{backchanneler_forward_pallas.1} parent=47 // pred_region
          %s713 = sand.u32 %s138, 1
          %s714 = scalar_lea.sflag [#allocation3], %s713
          %s715 = sand.u32 %s138, 1
          %s716 = scalar_lea.vmem [#allocation2], %s715
          %717 = dma.done %s714, 16
        $region52: #{backchanneler_forward_pallas.1} parent=47 // pred_fallthru
          _
      $region48: #{backchanneler_forward_pallas.1} parent=5 // pred_fallthru
        _
    $region6: #{backchanneler_forward_pallas.1} parent=1 // loop_footer
      %s18 = sadd.s32 1, %s14
    $region7: #{backchanneler_forward_pallas.1} parent=1 // loop_footer_branch
      %13 = sbr.rel target = $region3
    $region8: #{backchanneler_forward_pallas.1} parent=1 // loop_exit
      _
    %718 = vsyncpa [#allocation3], 1
    %s719 = scalar_lea.sflag [#allocation3], 1
    %720 = vsyncpa %s719, 1

</llo_original>
